<compile_context>
chip_gen: v7x
topology: tpu7x:2x2x1
jax: 0.10.0
libtpu: 0.0.40
codegen_flags: <defaults>
</compile_context>

<pallas_src>
import jax
import jax.numpy as jnp
from jax.experimental import pallas as pl
from jax.experimental.pallas import tpu as pltpu


def _round_up(x, m):
    return (x + m - 1) // m * m


# Single-buffer the grid-invariant weight/bias blocks (their index_map is
# constant, so double-buffering them only wastes VMEM).  Fall back silently if
# this jax build does not accept pipeline_mode.
try:
    _RESIDENT_KW = {"pipeline_mode": pl.Buffered(1)}
    pl.BlockSpec((8, 128), lambda i: (0, 0), **_RESIDENT_KW)
except Exception:  # pragma: no cover
    _RESIDENT_KW = {}


# ----------------------------- kernels ---------------------------------------

def _expert_kernel_eval(x_ref, w1_ref, b1_ref, w2_ref, b2_ref, o_ref):
    """Inference path (Dropout is identity in eval mode)."""
    x = x_ref[...].astype(w1_ref.dtype)                    # bf16 MXU operand
    h = jnp.dot(x, w1_ref[...], preferred_element_type=jnp.float32)
    h = jnp.maximum(h + b1_ref[...], 0.0)                  # bias + ReLU in f32
    y = jnp.dot(h.astype(w2_ref.dtype), w2_ref[...],
                preferred_element_type=jnp.float32)
    y = y + b2_ref[...]
    o_ref[...] = y.astype(o_ref.dtype)


def _expert_kernel_train(x_ref, w1_ref, b1_ref, w2_ref, b2_ref, mask_ref, o_ref):
    """Training path: inverted dropout via a pre-scaled keep mask (0 or 1/(1-p))."""
    x = x_ref[...].astype(w1_ref.dtype)
    h = jnp.dot(x, w1_ref[...], preferred_element_type=jnp.float32)
    h = jnp.maximum(h + b1_ref[...], 0.0)
    y = jnp.dot(h.astype(w2_ref.dtype), w2_ref[...],
                preferred_element_type=jnp.float32)
    y = (y + b2_ref[...]) * mask_ref[...]
    o_ref[...] = y.astype(o_ref.dtype)


# ----------------------------- wrapper ----------------------------------------

def expert_forward(x, params, *, training=False, drop_p=0.2, seed=0,
                   tm=256, use_bf16=True):
    """Forward pass of `Expert`.  x: (..., n_embed).  params: w1, b1, w2, b2."""
    w1, b1, w2, b2 = params["w1"], params["b1"], params["w2"], params["b2"]
    n_embed, hidden = w1.shape

    compute_dtype = jnp.bfloat16 if use_bf16 else jnp.float32
    w1c = w1.astype(compute_dtype)
    w2c = w2.astype(compute_dtype)
    b1_2d = b1.reshape(1, hidden).astype(jnp.float32)
    b2_2d = b2.reshape(1, n_embed).astype(jnp.float32)

    orig_shape = x.shape
    x2d = x.reshape(-1, n_embed)
    M = x2d.shape[0]

    # Row tile: as large as requested but never bigger than the (8-padded) row
    # count; always a multiple of 8 sublanes.  Rows are zero-padded up to the
    # tile so any B*T works while tm stays performance-optimal.
    tm_eff = _round_up(max(8, min(tm, _round_up(M, 8))), 8)
    Mp = _round_up(M, tm_eff)
    if Mp != M:
        x2d = jnp.pad(x2d, ((0, Mp - M), (0, 0)))

    grid = (Mp // tm_eff,)
    x_spec = pl.BlockSpec((tm_eff, n_embed), lambda i: (i, 0))
    o_spec = pl.BlockSpec((tm_eff, n_embed), lambda i: (i, 0))
    w1_spec = pl.BlockSpec((n_embed, hidden), lambda i: (0, 0), **_RESIDENT_KW)
    b1_spec = pl.BlockSpec((1, hidden), lambda i: (0, 0), **_RESIDENT_KW)
    w2_spec = pl.BlockSpec((hidden, n_embed), lambda i: (0, 0), **_RESIDENT_KW)
    b2_spec = pl.BlockSpec((1, n_embed), lambda i: (0, 0), **_RESIDENT_KW)
    out_shape = jax.ShapeDtypeStruct((Mp, n_embed), x.dtype)

    # Explicit scoped-VMEM budget: resident weights/biases + double-buffered
    # row-tile streams + f32 intermediates, with headroom (capped for v7x).
    cbytes = jnp.dtype(compute_dtype).itemsize
    iobytes = jnp.dtype(x.dtype).itemsize
    weights = 2 * n_embed * hidden * cbytes + (hidden + n_embed) * 4
    streams = 2 * 2 * tm_eff * n_embed * iobytes           # x + o, double-buffered
    if training:
        streams += 2 * tm_eff * n_embed * 4                # dropout-mask tiles
    inter = tm_eff * hidden * 4 + tm_eff * n_embed * 4     # h / y f32 temporaries
    need = weights + streams + inter
    vmem_limit = int(min(max(2 * need + (2 << 20), 16 << 20), 96 << 20))

    compiler_params = pltpu.CompilerParams(
        dimension_semantics=("parallel",),                 # row tiles independent
        vmem_limit_bytes=vmem_limit,
    )

    if not training:
        out = pl.pallas_call(
            _expert_kernel_eval,
            out_shape=out_shape,
            grid=grid,
            in_specs=[x_spec, w1_spec, b1_spec, w2_spec, b2_spec],
            out_specs=o_spec,
            compiler_params=compiler_params,
        )(x2d, w1c, b1_2d, w2c, b2_2d)
    else:
        keep = jax.random.bernoulli(jax.random.PRNGKey(seed),
                                    1.0 - drop_p, (Mp, n_embed))
        mask = keep.astype(jnp.float32) * (1.0 / (1.0 - drop_p))
        mask_spec = pl.BlockSpec((tm_eff, n_embed), lambda i: (i, 0))
        out = pl.pallas_call(
            _expert_kernel_train,
            out_shape=out_shape,
            grid=grid,
            in_specs=[x_spec, w1_spec, b1_spec, w2_spec, b2_spec, mask_spec],
            out_specs=o_spec,
            compiler_params=compiler_params,
        )(x2d, w1c, b1_2d, w2c, b2_2d, mask)

    if Mp != M:
        out = out[:M]
    return out.reshape(orig_shape)


def init_expert_params(key, n_embed, dtype=jnp.float32):
    """Deterministic init matching nn.Linear shapes (stored as (in, out))."""
    k1, k2, k3, k4 = jax.random.split(key, 4)
    hidden = 2 * n_embed
    lim1 = 1.0 / (n_embed ** 0.5)
    lim2 = 1.0 / (hidden ** 0.5)
    return {
        "w1": jax.random.uniform(k1, (n_embed, hidden), dtype, -lim1, lim1),
        "b1": jax.random.uniform(k2, (hidden,), dtype, -lim1, lim1),
        "w2": jax.random.uniform(k3, (hidden, n_embed), dtype, -lim2, lim2),
        "b2": jax.random.uniform(k4, (n_embed,), dtype, -lim2, lim2),
    }


# ----------------------------- main -------------------------------------------

if __name__ == "__main__":
    key = jax.random.PRNGKey(0)
    kx, kp = jax.random.split(key)

    batch, seq, n_embed = 2, 8, 32
    x = jax.random.normal(kx, (batch, seq, n_embed), dtype=jnp.float32)
    params = init_expert_params(kp, n_embed)

    # --- eval (Dropout = identity): check against a pure-JAX reference that
    # mirrors the kernel's bf16 operand rounding (f32 accumulation). ---
    y = jax.block_until_ready(expert_forward(x, params, training=False))
    assert y.shape == x.shape

    xb = x.astype(jnp.bfloat16).astype(jnp.float32)
    w1b = params["w1"].astype(jnp.bfloat16).astype(jnp.float32)
    w2b = params["w2"].astype(jnp.bfloat16).astype(jnp.float32)
    h_ref = jnp.maximum(xb @ w1b + params["b1"], 0.0)
    y_ref = h_ref.astype(jnp.bfloat16).astype(jnp.float32) @ w2b + params["b2"]
    assert jnp.allclose(y, y_ref, atol=1e-2, rtol=1e-2), \
        float(jnp.max(jnp.abs(y - y_ref)))

    # --- training (stochastic inverted dropout, p=0.2) ---
    y_train = jax.block_until_ready(
        expert_forward(x, params, training=True, drop_p=0.2, seed=123))
    assert y_train.shape == x.shape
    zero_frac = float(jnp.mean(y_train == 0.0))
    assert 0.05 < zero_frac < 0.45, zero_frac

    print("KERNEL_OK")
</pallas_src>

<mosaic_0001>
module attributes {stable_mosaic.version = 11 : i64} {
  func.func @_expert_kernel_eval(%arg0: i32, %arg1: memref<16x32xf32, #tpu.memory_space<vmem>>, %arg2: memref<32x64xbf16, #tpu.memory_space<vmem>>, %arg3: memref<1x64xf32, #tpu.memory_space<vmem>>, %arg4: memref<64x32xbf16, #tpu.memory_space<vmem>>, %arg5: memref<1x32xf32, #tpu.memory_space<vmem>>, %arg6: memref<16x32xf32, #tpu.memory_space<vmem>>) attributes {dimension_semantics = [#tpu.dimension_semantics<parallel>], iteration_bounds = array<i64: 1>, scalar_prefetch = 0 : i64, scratch_operands = 0 : i64, tpu.core_type = #tpu.core_type<tc>, window_params = [{transform_indices = @transform_0, window_bounds = array<i64: 16, 32>}, {pipeline_mode = #tpu.pipeline_mode<synchronous>, transform_indices = @transform_1, window_bounds = array<i64: 32, 64>}, {pipeline_mode = #tpu.pipeline_mode<synchronous>, transform_indices = @transform_2, window_bounds = array<i64: 1, 64>}, {pipeline_mode = #tpu.pipeline_mode<synchronous>, transform_indices = @transform_3, window_bounds = array<i64: 64, 32>}, {pipeline_mode = #tpu.pipeline_mode<synchronous>, transform_indices = @transform_4, window_bounds = array<i64: 1, 32>}, {transform_indices = @transform_5, window_bounds = array<i64: 16, 32>}]} {
    %c0 = arith.constant 0 : index
    %c0_0 = arith.constant 0 : index
    %0 = vector.load %arg1[%c0, %c0_0] : memref<16x32xf32, #tpu.memory_space<vmem>>, vector<16x32xf32>
    %1 = arith.truncf %0 : vector<16x32xf32> to vector<16x32xbf16>
    %c0_1 = arith.constant 0 : index
    %c0_2 = arith.constant 0 : index
    %2 = vector.load %arg2[%c0_1, %c0_2] : memref<32x64xbf16, #tpu.memory_space<vmem>>, vector<32x64xbf16>
    %cst = arith.constant dense<0.000000e+00> : vector<16x64xf32>
    %3 = tpu.matmul %1, %2, %cst {dimension_numbers = #tpu.dot_dimension_numbers<[1], [0], [0], [1], [0, 0, 1, 1], [], []>} : vector<16x32xbf16>, vector<32x64xbf16>, vector<16x64xf32> -> vector<16x64xf32>
    %c0_3 = arith.constant 0 : index
    %c0_4 = arith.constant 0 : index
    %4 = vector.load %arg3[%c0_3, %c0_4] : memref<1x64xf32, #tpu.memory_space<vmem>>, vector<1x64xf32>
    %5 = vector.broadcast %4 : vector<1x64xf32> to vector<16x64xf32>
    %6 = arith.addf %3, %5 : vector<16x64xf32>
    %cst_5 = arith.constant 0.000000e+00 : f32
    %7 = vector.broadcast %cst_5 : f32 to vector<16x64xf32>
    %8 = arith.maximumf %6, %7 : vector<16x64xf32>
    %9 = arith.truncf %8 : vector<16x64xf32> to vector<16x64xbf16>
    %c0_6 = arith.constant 0 : index
    %c0_7 = arith.constant 0 : index
    %10 = vector.load %arg4[%c0_6, %c0_7] : memref<64x32xbf16, #tpu.memory_space<vmem>>, vector<64x32xbf16>
    %cst_8 = arith.constant dense<0.000000e+00> : vector<16x32xf32>
    %11 = tpu.matmul %9, %10, %cst_8 {dimension_numbers = #tpu.dot_dimension_numbers<[1], [0], [0], [1], [0, 0, 1, 1], [], []>} : vector<16x64xbf16>, vector<64x32xbf16>, vector<16x32xf32> -> vector<16x32xf32>
    %c0_9 = arith.constant 0 : index
    %c0_10 = arith.constant 0 : index
    %12 = vector.load %arg5[%c0_9, %c0_10] : memref<1x32xf32, #tpu.memory_space<vmem>>, vector<1x32xf32>
    %13 = vector.broadcast %12 : vector<1x32xf32> to vector<16x32xf32>
    %14 = arith.addf %11, %13 : vector<16x32xf32>
    %c0_11 = arith.constant 0 : index
    %c0_12 = arith.constant 0 : index
    %15 = vector.load %arg6[%c0_11, %c0_12] : memref<16x32xf32, #tpu.memory_space<vmem>>, vector<16x32xf32>
    tpu.vector_store %arg6[%c0_11, %c0_12], %14 {strides = array<i32>} : memref<16x32xf32, #tpu.memory_space<vmem>>, vector<16x32xf32>,
    return
  }
  func.func @transform_0(%arg0: i32) -> (i32, i32) {
    %c0_i32 = arith.constant 0 : i32
    %c0_i32_0 = arith.constant 0 : i32
    return %arg0, %c0_i32 : i32, i32
  }
  func.func @transform_1(%arg0: i32) -> (i32, i32) {
    %c0_i32 = arith.constant 0 : i32
    %c0_i32_0 = arith.constant 0 : i32
    %c0_i32_1 = arith.constant 0 : i32
    return %c0_i32, %c0_i32_0 : i32, i32
  }
  func.func @transform_2(%arg0: i32) -> (i32, i32) {
    %c0_i32 = arith.constant 0 : i32
    %c0_i32_0 = arith.constant 0 : i32
    %c0_i32_1 = arith.constant 0 : i32
    return %c0_i32, %c0_i32_0 : i32, i32
  }
  func.func @transform_3(%arg0: i32) -> (i32, i32) {
    %c0_i32 = arith.constant 0 : i32
    %c0_i32_0 = arith.constant 0 : i32
    %c0_i32_1 = arith.constant 0 : i32
    return %c0_i32, %c0_i32_0 : i32, i32
  }
  func.func @transform_4(%arg0: i32) -> (i32, i32) {
    %c0_i32 = arith.constant 0 : i32
    %c0_i32_0 = arith.constant 0 : i32
    %c0_i32_1 = arith.constant 0 : i32
    return %c0_i32, %c0_i32_0 : i32, i32
  }
  func.func @transform_5(%arg0: i32) -> (i32, i32) {
    %c0_i32 = arith.constant 0 : i32
    %c0_i32_0 = arith.constant 0 : i32
    return %arg0, %c0_i32 : i32, i32
  }
}

</mosaic_0001>

<llo_original>
// kernel: tpu_custom_call.1
$region0: #{tpu_custom_call.1}
  #allocation0 [shape = 'u32[]', space=smem, size = 0x4, offset = 0x4, fixed_abs, tag = 'smem constant byte address 0x4 - core index']
  #allocation1 [shape = 'u32[144,128]{1,0:T(1,128)}', space=vmem, size = 0x12000, scoped, tag = 'internal scratch']
  %s0 = inlined_call_operand.vmem [shape: f32[16,32], index: 0, kind: input, shape index: {}]
  %s1 = inlined_call_operand.vmem [shape: bf16[32,64], index: 1, kind: input, shape index: {}]
  %s2 = inlined_call_operand.vmem [shape: f32[1,64], index: 2, kind: input, shape index: {}]
  %s3 = inlined_call_operand.vmem [shape: bf16[64,32], index: 3, kind: input, shape index: {}]
  %s4 = inlined_call_operand.vmem [shape: f32[1,32], index: 4, kind: input, shape index: {}]
  %s5 = inlined_call_operand.hbm [shape: f32[16,32], index: 5, kind: output, shape index: {}]
  %s6 = sld [smem:[#allocation0]]
  $region30: #{tpu_custom_call.1} parent=0
    _
  %s8 = ssub.s32 1, %s6
  %s9 = scalar_select 0, %s8, %s6
  $region1: #{tpu_custom_call.1} parent=0
    #allocation2 [shape = 'u8[8192]{0}', space=vmem, size = 0x2000, scoped, tag = 'output window, operand 0, single buffered']
    #allocation3 [shape = 's32[1]{0}', space=sflag, size = 0x4, scoped, tag = 'scoped memory for tpu_custom_call.1']
    %10 = vsyncpa [#allocation3], 0
    // Predicated region
    $region2: #{tpu_custom_call.1} parent=1 // pred_check
      _
    $region3: #{tpu_custom_call.1} parent=1 // pred_check_branch
      %12 = sbr.rel (0) target = $region5
    $region4: #{tpu_custom_call.1} parent=1 // pred_region
      _
    $region5: #{tpu_custom_call.1} parent=1 // pred_fallthru
      _
    // Predicated region
    $region6: #{tpu_custom_call.1} parent=1 // pred_check
      _
    $region7: #{tpu_custom_call.1} parent=1 // pred_check_branch
      %14 = sbr.rel (0) target = $region9
    $region8: #{tpu_custom_call.1} parent=1 // pred_region
      _
    $region9: #{tpu_custom_call.1} parent=1 // pred_fallthru
      _
    // Predicated region
    $region10: #{tpu_custom_call.1} parent=1 // pred_check
      _
    $region11: #{tpu_custom_call.1} parent=1 // pred_check_branch
      %16 = sbr.rel (0) target = $region13
    $region12: #{tpu_custom_call.1} parent=1 // pred_region
      _
    $region13: #{tpu_custom_call.1} parent=1 // pred_fallthru
      _
    // Predicated region
    $region14: #{tpu_custom_call.1} parent=1 // pred_check
      _
    $region15: #{tpu_custom_call.1} parent=1 // pred_check_branch
      %18 = sbr.rel (0) target = $region17
    $region16: #{tpu_custom_call.1} parent=1 // pred_region
      _
    $region17: #{tpu_custom_call.1} parent=1 // pred_fallthru
      _
    // Predicated region
    $region18: #{tpu_custom_call.1} parent=1 // pred_check
      _
    $region19: #{tpu_custom_call.1} parent=1 // pred_check_branch
      %20 = sbr.rel (0) target = $region21
    $region20: #{tpu_custom_call.1} parent=1 // pred_region
      _
    $region21: #{tpu_custom_call.1} parent=1 // pred_fallthru
      _
    %v22 = vld [vmem:[%s0] sm:$0xff]
    %v23 = vld [vmem:[%s0 + $0x8] sm:$0xff]
    %v24 = vpack.c.bf16 %v23, %v22
    %v25 = vld [vmem:[%s1] sm:$0xf]
    %v26 = vld [vmem:[%s1 + $0x4] sm:$0xf]
    %v27 = vld [vmem:[%s1 + $0x8] sm:$0xf]
    %v28 = vld [vmem:[%s1 + $0xc] sm:$0xf]
    %v29 = vld [vmem:[%s2] sm:$0x1]
    %v31 = vlaneseq
    %v32 = vshrl.u32 %v31, 7
    %v33 = vsub.s32 0, %v32
    %v34 = vrot.slane %v29, %v33
    %v40 = vunpack.c.l.b16 %v25
    %v41 = vunpack.c.l.b16 %v26
    %v42 = vunpack.c.l.b16 %v27
    %v43 = vunpack.c.l.b16 %v28
    %v44 = vpack.c.b16 %v41, %v40
    %v45 = vpack.c.b16 %v43, %v42
    %vm48 = vcmask 261120
    %v50 = vsel %vm48, %v24, 0
    %52 = vmatprep.subr.bf16.mxu0 0
    %53 = vmatpush1.bf16.msra.mxu0 %v44
    %54 = vmatprep.subr.bf16.mxu0 0
    %55 = vmatpush1.bf16.msra.mxu0 %v45
    %56 = vmatprep.subr.bf16.mxu0 0
    %57 = vmatpush1.bf16.msra.mxu0 0
    %58 = vmatprep.subr.bf16.mxu0 0
    %59 = vmatpush1.bf16.msra.mxu0 0
    %60 = vmatprep.subr.bf16.mxu0 0
    %61 = vmatpush1.bf16.msra.mxu0 0
    %62 = vmatprep.subr.bf16.mxu0 0
    %63 = vmatpush1.bf16.msra.mxu0 0
    %64 = vmatprep.subr.bf16.mxu0 0
    %65 = vmatpush1.bf16.msra.mxu0 0
    %66 = vmatprep.subr.bf16.mxu0 0
    %67 = vmatpush1.bf16.msra.mxu0 0
    %68 = vmatprep.subr.bf16.mxu0 0
    %69 = vmatpush1.bf16.msra.mxu0 0
    %70 = vmatprep.subr.bf16.mxu0 0
    %71 = vmatpush1.bf16.msra.mxu0 0
    %72 = vmatprep.subr.bf16.mxu0 0
    %73 = vmatpush1.bf16.msra.mxu0 0
    %74 = vmatprep.subr.bf16.mxu0 0
    %75 = vmatpush1.bf16.msra.mxu0 0
    %76 = vmatprep.subr.bf16.mxu0 0
    %77 = vmatpush1.bf16.msra.mxu0 0
    %78 = vmatprep.subr.bf16.mxu0 0
    %79 = vmatpush1.bf16.msra.mxu0 0
    %80 = vmatprep.subr.bf16.mxu0 0
    %81 = vmatpush1.bf16.msra.mxu0 0
    %82 = vmatprep.subr.bf16.mxu0 0
    %83 = vmatpush1.bf16.msra.mxu0 0
    %84 = vmatprep.mubr.bf16.mxu0 0
    %85 = vmatmul.mubr.bf16.gmra.mrb[0].mxu0 %v50
    %v86 = vpop.f32.mrb[0].mxu0
    %v87 = vadd.f32 %v34, %v86
    %v88 = vpop.f32.mrb[0].mxu0
    %v89 = vpop.f32.mrb[0].mxu0
    %v90 = vadd.f32 %v34, %v89
    %v91 = vpop.f32.mrb[0].mxu0
    %92 = vdwg.mxu0
    %v93 = vmax.f32 %v87, 0.0
    %v94 = vmax.f32 %v90, 0.0
    %v95 = vpack.c.bf16 %v94, %v93
    %v96 = vld [vmem:[%s3] sm:$0xf]
    %v97 = vld [vmem:[%s3 + $0x4] sm:$0xf]
    %v98 = vld [vmem:[%s3 + $0x8] sm:$0xf]
    %v99 = vld [vmem:[%s3 + $0xc] sm:$0xf]
    %v100 = vld [vmem:[%s3 + $0x10] sm:$0xf]
    %v101 = vld [vmem:[%s3 + $0x14] sm:$0xf]
    %v102 = vld [vmem:[%s3 + $0x18] sm:$0xf]
    %v103 = vld [vmem:[%s3 + $0x1c] sm:$0xf]
    %v104 = vld [vmem:[%s4] sm:$0x1]
    %v106 = vlaneseq
    %v107 = vshrl.u32 %v106, 7
    %v108 = vsub.s32 0, %v107
    %v109 = vrot.slane %v104, %v108
    %v119 = vunpack.c.l.b16 %v96
    %v120 = vunpack.c.l.b16 %v97
    %v121 = vunpack.c.l.b16 %v98
    %v122 = vunpack.c.l.b16 %v99
    %v123 = vunpack.c.l.b16 %v100
    %v124 = vunpack.c.l.b16 %v101
    %v125 = vunpack.c.l.b16 %v102
    %v126 = vunpack.c.l.b16 %v103
    %v127 = vpack.c.b16 %v120, %v119
    %v128 = vpack.c.b16 %v122, %v121
    %v129 = vpack.c.b16 %v124, %v123
    %v130 = vpack.c.b16 %v126, %v125
    %vm135 = vcmask 523264
    %v137 = vsel %vm135, %v95, 0
    %139 = vmatprep.subr.bf16.mxu0 0
    %140 = vmatpush1.bf16.msra.mxu0 %v127
    %141 = vmatprep.subr.bf16.mxu0 0
    %142 = vmatpush1.bf16.msra.mxu0 %v128
    %143 = vmatprep.subr.bf16.mxu0 0
    %144 = vmatpush1.bf16.msra.mxu0 %v129
    %145 = vmatprep.subr.bf16.mxu0 0
    %146 = vmatpush1.bf16.msra.mxu0 %v130
    %147 = vmatprep.subr.bf16.mxu0 0
    %148 = vmatpush1.bf16.msra.mxu0 0
    %149 = vmatprep.subr.bf16.mxu0 0
    %150 = vmatpush1.bf16.msra.mxu0 0
    %151 = vmatprep.subr.bf16.mxu0 0
    %152 = vmatpush1.bf16.msra.mxu0 0
    %153 = vmatprep.subr.bf16.mxu0 0
    %154 = vmatpush1.bf16.msra.mxu0 0
    %155 = vmatprep.subr.bf16.mxu0 0
    %156 = vmatpush1.bf16.msra.mxu0 0
    %157 = vmatprep.subr.bf16.mxu0 0
    %158 = vmatpush1.bf16.msra.mxu0 0
    %159 = vmatprep.subr.bf16.mxu0 0
    %160 = vmatpush1.bf16.msra.mxu0 0
    %161 = vmatprep.subr.bf16.mxu0 0
    %162 = vmatpush1.bf16.msra.mxu0 0
    %163 = vmatprep.subr.bf16.mxu0 0
    %164 = vmatpush1.bf16.msra.mxu0 0
    %165 = vmatprep.subr.bf16.mxu0 0
    %166 = vmatpush1.bf16.msra.mxu0 0
    %167 = vmatprep.subr.bf16.mxu0 0
    %168 = vmatpush1.bf16.msra.mxu0 0
    %169 = vmatprep.subr.bf16.mxu0 0
    %170 = vmatpush1.bf16.msra.mxu0 0
    %171 = vmatprep.mubr.bf16.mxu0 0
    %172 = vmatmul.mubr.bf16.gmra.mrb[0].mxu0 %v137
    %v173 = vpop.f32.mrb[0].mxu0
    %v174 = vadd.f32 %v109, %v173
    %v175 = vpop.f32.mrb[0].mxu0
    %v176 = vpop.f32.mrb[0].mxu0
    %v177 = vadd.f32 %v109, %v176
    %v178 = vpop.f32.mrb[0].mxu0
    %179 = vdwg.mxu0
    %180 = vst.msk [vmem:[#allocation2] sm:$0xff] %vm48, %v174
    %181 = vst.msk [vmem:[#allocation2 + $0x8] sm:$0xff] %vm48, %v177
    // Predicated region
    $region22: #{tpu_custom_call.1} parent=1 // pred_check
      _
    $region23: #{tpu_custom_call.1} parent=1 // pred_check_branch
      %183 = sbr.rel (0) target = $region25
    $region24: #{tpu_custom_call.1} parent=1 // pred_region
      %s185 = ssub.s32 256, 256
      %186 = vsyncadd [#allocation3], %s185
      %s187 = sshll.u32 [#allocation2], 4
      %s188 = int_to_ptr.vmem [resolvable:$true] %s187
      %193 = dma.vmem_to_hbm [thread:$0]  %s188, 256, %s5, [#allocation3], 128, 128, 8
    $region25: #{tpu_custom_call.1} parent=1 // pred_fallthru
      _
    // Predicated region
    $region26: #{tpu_custom_call.1} parent=1 // pred_check
      _
    $region27: #{tpu_custom_call.1} parent=1 // pred_check_branch
      %195 = sbr.rel (0) target = $region29
    $region28: #{tpu_custom_call.1} parent=1 // pred_region
      %196 = dma.done [#allocation3], 256
    $region29: #{tpu_custom_call.1} parent=1 // pred_fallthru
      _
    %197 = vsyncpa [#allocation3], 1

</llo_original>
